<compile_context>
chip_gen: v7x
topology: tpu7x:2x2x1
jax: 0.10.0
libtpu: 0.0.40
codegen_flags: <defaults>
</compile_context>

<pallas_src>
import jax
import jax.numpy as jnp
from jax import lax
from jax.experimental import pallas as pl
from jax.experimental.pallas import tpu as pltpu

HIDDEN = 512
BN_EPS = 1e-5
LANE = 128
MAX_BATCH_TILE = 512   # v5e-safe tile cap; costs <1 us of step overhead on v6e/v7x


# --------------------------------------------------------------------------- #
# Kernels
# --------------------------------------------------------------------------- #
def _linear1(x_ref, c_ref, w1x_ref, w1c_ref):
    """h0 = x @ W1x + c @ W1c (bf16 MXU inputs, f32 accumulation).

    Linear-1 bias is intentionally omitted: it cancels exactly through
    training-mode BatchNorm (h - mean(h) == h0 - mean(h0))."""
    return (jnp.dot(x_ref[...].astype(jnp.bfloat16), w1x_ref[...],
                    preferred_element_type=jnp.float32)
            + jnp.dot(c_ref[...].astype(jnp.bfloat16), w1c_ref[...],
                      preferred_element_type=jnp.float32))


def _write_stats(h0, stats_ref):
    # Per-tile partial batch statistics; reduced across tiles in plain XLA.
    stats_ref[0, 0:1, :] = jnp.sum(h0, axis=0, keepdims=True)
    stats_ref[0, 1:2, :] = jnp.sum(h0 * h0, axis=0, keepdims=True)


def _stats_kernel(x_ref, c_ref, w1x_ref, w1c_ref, stats_ref):
    _write_stats(_linear1(x_ref, c_ref, w1x_ref, w1c_ref), stats_ref)


def _stats_cache_kernel(x_ref, c_ref, w1x_ref, w1c_ref, stats_ref, h_ref):
    h0 = _linear1(x_ref, c_ref, w1x_ref, w1c_ref)
    _write_stats(h0, stats_ref)
    h_ref[...] = h0.astype(jnp.bfloat16)     # cache hidden, skip recompute later


def _mlp_tail(h0, scale_ref, shift_ref, w2_ref, b2_ref, wh_ref, bh_ref, out_ref):
    # BatchNorm folded into one per-feature FMA, then ReLU.
    hn = jnp.maximum(h0 * scale_ref[...] + shift_ref[...], 0.0)
    # Linear 2: (TB, 512) @ (512, 512) + b2
    h2 = (jnp.dot(hn.astype(jnp.bfloat16), w2_ref[...],
                  preferred_element_type=jnp.float32) + b2_ref[...])
    # Fused heads: [means | logvar | pad] in one lane-dense matmul/store.
    out_ref[...] = (jnp.dot(h2.astype(jnp.bfloat16), wh_ref[...],
                            preferred_element_type=jnp.float32) + bh_ref[...])


def _mlp_recompute_kernel(x_ref, c_ref, w1x_ref, w1c_ref, scale_ref, shift_ref,
                          w2_ref, b2_ref, wh_ref, bh_ref, out_ref):
    _mlp_tail(_linear1(x_ref, c_ref, w1x_ref, w1c_ref),
              scale_ref, shift_ref, w2_ref, b2_ref, wh_ref, bh_ref, out_ref)


def _mlp_cached_kernel(h_ref, scale_ref, shift_ref,
                       w2_ref, b2_ref, wh_ref, bh_ref, out_ref):
    _mlp_tail(h_ref[...].astype(jnp.float32),
              scale_ref, shift_ref, w2_ref, b2_ref, wh_ref, bh_ref, out_ref)


# --------------------------------------------------------------------------- #
# Wrapper
# --------------------------------------------------------------------------- #
def _pick_batch_tile(batch):
    for tb in (MAX_BATCH_TILE, 256, 128, 64, 32, 16, 8):
        if batch % tb == 0:
            return tb
    return batch          # odd/tiny batch: single full-array tile


def _compiler_params(vmem_estimate_bytes):
    # Explicit, auditable VMEM budget (footprint estimate + scheduler headroom),
    # capped at v7x physical capacity.
    limit = int(min(vmem_estimate_bytes + (16 << 20), 64 << 20))
    return pltpu.CompilerParams(dimension_semantics=("parallel",),
                                vmem_limit_bytes=limit)


def encoder_forward(x, c, packed, n_latents, cache_hidden=None):
    """x: (B, n_inputs) f32, c: (B, n_cond) f32 -> (means, logvar) f32."""
    batch, n_inputs = x.shape
    n_cond = c.shape[1]
    d_in = n_inputs + n_cond
    n_pad = packed["wh"].shape[1]
    tb = _pick_batch_tile(batch)
    n_tiles = batch // tb
    if cache_hidden is None:
        # Recompute Linear-1 when inputs are narrow; cache bf16 h when wide.
        cache_hidden = d_in >= 256

    x_spec = pl.BlockSpec((tb, n_inputs), lambda i: (i, 0))
    c_spec = pl.BlockSpec((tb, n_cond), lambda i: (i, 0))
    w1x_spec = pl.BlockSpec((n_inputs, HIDDEN), lambda i: (0, 0))
    w1c_spec = pl.BlockSpec((n_cond, HIDDEN), lambda i: (0, 0))
    row_spec = lambda n: pl.BlockSpec((1, n), lambda i: (0, 0))
    stats_spec = pl.BlockSpec((1, 2, HIDDEN), lambda i: (i, 0, 0))
    h_spec = pl.BlockSpec((tb, HIDDEN), lambda i: (i, 0))
    out_spec = pl.BlockSpec((tb, n_pad), lambda i: (i, 0))

    w1_bytes = d_in * HIDDEN * 2                     # bf16 Linear-1 weights

    # ---------------- pass 1: Linear-1 + per-tile partial statistics --------
    stats_shape = jax.ShapeDtypeStruct((n_tiles, 2, HIDDEN), jnp.float32)
    est1 = 2 * (tb * d_in * 4 + w1_bytes + 2 * HIDDEN * 4) + 2 * tb * HIDDEN * 4
    flops1 = 2 * batch * d_in * HIDDEN + 3 * batch * HIDDEN
    bytes1 = batch * d_in * 4 + w1_bytes + n_tiles * 2 * HIDDEN * 4

    grid1 = pltpu.PrefetchScalarGridSpec(
        num_scalar_prefetch=0, grid=(n_tiles,),
        in_specs=[x_spec, c_spec, w1x_spec, w1c_spec],
        out_specs=([stats_spec, h_spec] if cache_hidden else stats_spec))

    if cache_hidden:
        est1 += 2 * tb * HIDDEN * 2
        bytes1 += batch * HIDDEN * 2
        stats, h_cache = pl.pallas_call(
            _stats_cache_kernel,
            out_shape=(stats_shape,
                       jax.ShapeDtypeStruct((batch, HIDDEN), jnp.bfloat16)),
            grid_spec=grid1,
            compiler_params=_compiler_params(est1),
            cost_estimate=pl.CostEstimate(flops=flops1, transcendentals=0,
                                          bytes_accessed=bytes1),
        )(x, c, packed["w1x"], packed["w1c"])
    else:
        h_cache = None
        stats = pl.pallas_call(
            _stats_kernel,
            out_shape=stats_shape,
            grid_spec=grid1,
            compiler_params=_compiler_params(est1),
            cost_estimate=pl.CostEstimate(flops=flops1, transcendentals=0,
                                          bytes_accessed=bytes1),
        )(x, c, packed["w1x"], packed["w1c"])

    # ------------- tiny XLA reduce: fold BatchNorm into scale/shift ---------
    inv_b = 1.0 / batch
    mean0 = stats[:, 0, :].sum(axis=0, keepdims=True) * inv_b
    var = stats[:, 1, :].sum(axis=0, keepdims=True) * inv_b - mean0 * mean0
    var = jnp.maximum(var, 0.0)                      # guard f32 cancellation
    scale = packed["gamma"] * lax.rsqrt(var + BN_EPS)
    shift = packed["beta"] - mean0 * scale

    # ---------------- pass 2: normalize + ReLU + Linear-2 + fused heads -----
    head_bytes = (HIDDEN * HIDDEN + HIDDEN * n_pad) * 2 + (2 * HIDDEN + n_pad) * 4
    flops2 = 2 * batch * (HIDDEN * HIDDEN + HIDDEN * n_pad) + 4 * batch * HIDDEN
    bytes2 = head_bytes + 2 * HIDDEN * 4 + batch * n_pad * 4

    if cache_hidden:
        est2 = (2 * (tb * HIDDEN * 2 + head_bytes + tb * n_pad * 4)
                + 3 * tb * HIDDEN * 4)
        bytes2 += batch * HIDDEN * 2
        out = pl.pallas_call(
            _mlp_cached_kernel,
            out_shape=jax.ShapeDtypeStruct((batch, n_pad), jnp.float32),
            grid_spec=pltpu.PrefetchScalarGridSpec(
                num_scalar_prefetch=0, grid=(n_tiles,),
                in_specs=[h_spec, row_spec(HIDDEN), row_spec(HIDDEN),
                          pl.BlockSpec((HIDDEN, HIDDEN), lambda i: (0, 0)),
                          row_spec(HIDDEN),
                          pl.BlockSpec((HIDDEN, n_pad), lambda i: (0, 0)),
                          row_spec(n_pad)],
                out_specs=out_spec),
            compiler_params=_compiler_params(est2),
            cost_estimate=pl.CostEstimate(flops=flops2, transcendentals=0,
                                          bytes_accessed=bytes2),
        )(h_cache, scale, shift, packed["w2"], packed["b2"],
          packed["wh"], packed["bh"])
    else:
        flops2 += 2 * batch * d_in * HIDDEN
        bytes2 += batch * d_in * 4 + w1_bytes
        est2 = (2 * (tb * d_in * 4 + w1_bytes + head_bytes + tb * n_pad * 4)
                + 3 * tb * HIDDEN * 4)
        out = pl.pallas_call(
            _mlp_recompute_kernel,
            out_shape=jax.ShapeDtypeStruct((batch, n_pad), jnp.float32),
            grid_spec=pltpu.PrefetchScalarGridSpec(
                num_scalar_prefetch=0, grid=(n_tiles,),
                in_specs=[x_spec, c_spec, w1x_spec, w1c_spec,
                          row_spec(HIDDEN), row_spec(HIDDEN),
                          pl.BlockSpec((HIDDEN, HIDDEN), lambda i: (0, 0)),
                          row_spec(HIDDEN),
                          pl.BlockSpec((HIDDEN, n_pad), lambda i: (0, 0)),
                          row_spec(n_pad)],
                out_specs=out_spec),
            compiler_params=_compiler_params(est2),
            cost_estimate=pl.CostEstimate(flops=flops2, transcendentals=0,
                                          bytes_accessed=bytes2),
        )(x, c, packed["w1x"], packed["w1c"], scale, shift,
          packed["w2"], packed["b2"], packed["wh"], packed["bh"])

    means = out[:, :n_latents]
    logvar = out[:, n_latents:2 * n_latents]
    return means, logvar


# --------------------------------------------------------------------------- #
# Parameters (PyTorch-equivalent f32 canon + one-time packing for the kernel)
# --------------------------------------------------------------------------- #
def init_params(key, n_inputs, n_latents, n_cond):
    d_in = n_inputs + n_cond
    ks = jax.random.split(key, 4)

    def lin(k, fan_in, fan_out):
        bound = 1.0 / jnp.sqrt(fan_in)
        kw, kb = jax.random.split(k)
        w = jax.random.uniform(kw, (fan_in, fan_out), jnp.float32, -bound, bound)
        b = jax.random.uniform(kb, (1, fan_out), jnp.float32, -bound, bound)
        return w, b

    w1, b1 = lin(ks[0], d_in, HIDDEN)
    w2, b2 = lin(ks[1], HIDDEN, HIDDEN)
    wm, bm = lin(ks[2], HIDDEN, n_latents)
    wv, bv = lin(ks[3], HIDDEN, n_latents)
    gamma = jnp.ones((1, HIDDEN), jnp.float32)   # BatchNorm1d default weight
    beta = jnp.zeros((1, HIDDEN), jnp.float32)   # BatchNorm1d default bias
    return dict(w1=w1, b1=b1, gamma=gamma, beta=beta,
                w2=w2, b2=b2, wm=wm, bm=bm, wv=wv, bv=bv)


def pack_params(params, n_inputs):
    """One-time repack: split w1, fuse+pad the heads, cast big weights to bf16.

    Note: b1 is not packed - it cancels through training-mode BatchNorm."""
    n_latents = params["wm"].shape[1]
    wh = jnp.concatenate([params["wm"], params["wv"]], axis=1)
    bh = jnp.concatenate([params["bm"], params["bv"]], axis=1)
    n_pad = max(LANE, -(-wh.shape[1] // LANE) * LANE)
    pad = n_pad - wh.shape[1]
    wh = jnp.pad(wh, ((0, 0), (0, pad)))
    bh = jnp.pad(bh, ((0, 0), (0, pad)))
    return dict(
        w1x=params["w1"][:n_inputs].astype(jnp.bfloat16),
        w1c=params["w1"][n_inputs:].astype(jnp.bfloat16),
        gamma=params["gamma"],
        beta=params["beta"],
        w2=params["w2"].astype(jnp.bfloat16),
        b2=params["b2"],
        wh=wh.astype(jnp.bfloat16),
        bh=bh,
    )


# --------------------------------------------------------------------------- #
# References
# --------------------------------------------------------------------------- #
def encoder_reference(x, c, p, weight_dtype=jnp.float32):
    """Plain-JAX reference; weight_dtype=bf16 mirrors the kernel's casting."""
    def mm(a, w):
        return jnp.dot(a.astype(weight_dtype), w.astype(weight_dtype),
                       preferred_element_type=jnp.float32)

    xc = jnp.concatenate([x, c], axis=1)
    h = mm(xc, p["w1"]) + p["b1"]
    mu = jnp.mean(h, axis=0, keepdims=True)
    var = jnp.mean(h * h, axis=0, keepdims=True) - mu * mu
    h = (h - mu) * lax.rsqrt(var + BN_EPS) * p["gamma"] + p["beta"]
    h = jnp.maximum(h, 0.0)
    h = mm(h, p["w2"]) + p["b2"]
    return mm(h, p["wm"]) + p["bm"], mm(h, p["wv"]) + p["bv"]


# --------------------------------------------------------------------------- #
# Self-test
# --------------------------------------------------------------------------- #
if __name__ == "__main__":
    B, n_inputs, n_cond, n_latents = 8, 16, 4, 8

    key = jax.random.PRNGKey(0)
    kx, kc, kp = jax.random.split(key, 3)
    x = jax.random.normal(kx, (B, n_inputs), jnp.float32)
    c = jax.random.normal(kc, (B, n_cond), jnp.float32)
    params = init_params(kp, n_inputs, n_latents, n_cond)
    packed = pack_params(params, n_inputs)

    means, logvar = encoder_forward(x, c, packed, n_latents)
    jax.block_until_ready((means, logvar))

    # Tight check against a reference using the same bf16 weights/activations.
    m_bf, lv_bf = encoder_reference(x, c, params, weight_dtype=jnp.bfloat16)
    assert jnp.allclose(means, m_bf, atol=2e-3, rtol=2e-3)
    assert jnp.allclose(logvar, lv_bf, atol=2e-3, rtol=2e-3)

    # Loose check against the exact f32 module semantics (bf16 weights only
    # perturb the result at the ~1e-2 level).
    m_f32, lv_f32 = encoder_reference(x, c, params, weight_dtype=jnp.float32)
    assert jnp.allclose(means, m_f32, atol=1e-1, rtol=1e-1)
    assert jnp.allclose(logvar, lv_f32, atol=1e-1, rtol=1e-1)

    # Exercise the cached-hidden path (selected automatically for wide inputs);
    # bf16 rounding of the cached h only perturbs the output at ~1e-3.
    m_c, lv_c = encoder_forward(x, c, packed, n_latents, cache_hidden=True)
    jax.block_until_ready((m_c, lv_c))
    assert jnp.allclose(m_c, means, atol=2e-2, rtol=2e-2)
    assert jnp.allclose(lv_c, logvar, atol=2e-2, rtol=2e-2)

    print("KERNEL_OK")
</pallas_src>

<mosaic_0001>
module attributes {stable_mosaic.version = 11 : i64} {
  func.func @_stats_kernel(%arg0: i32, %arg1: memref<8x16xf32, #tpu.memory_space<vmem>>, %arg2: memref<8x4xf32, #tpu.memory_space<vmem>>, %arg3: memref<16x512xbf16, #tpu.memory_space<vmem>>, %arg4: memref<4x512xbf16, #tpu.memory_space<vmem>>, %arg5: memref<1x2x512xf32, #tpu.memory_space<vmem>>) attributes {dimension_semantics = [#tpu.dimension_semantics<parallel>], iteration_bounds = array<i64: 1>, scalar_prefetch = 0 : i64, scratch_operands = 0 : i64, tpu.core_type = #tpu.core_type<tc>, window_params = [{transform_indices = @transform_0, window_bounds = array<i64: 8, 16>}, {transform_indices = @transform_1, window_bounds = array<i64: 8, 4>}, {pipeline_mode = #tpu.pipeline_mode<synchronous>, transform_indices = @transform_2, window_bounds = array<i64: 16, 512>}, {pipeline_mode = #tpu.pipeline_mode<synchronous>, transform_indices = @transform_3, window_bounds = array<i64: 4, 512>}, {transform_indices = @transform_4, window_bounds = array<i64: 1, 2, 512>}]} {
    %c0 = arith.constant 0 : index
    %c0_0 = arith.constant 0 : index
    %0 = vector.load %arg1[%c0, %c0_0] : memref<8x16xf32, #tpu.memory_space<vmem>>, vector<8x16xf32>
    %1 = arith.truncf %0 : vector<8x16xf32> to vector<8x16xbf16>
    %c0_1 = arith.constant 0 : index
    %c0_2 = arith.constant 0 : index
    %2 = vector.load %arg3[%c0_1, %c0_2] : memref<16x512xbf16, #tpu.memory_space<vmem>>, vector<16x512xbf16>
    %cst = arith.constant dense<0.000000e+00> : vector<8x512xf32>
    %3 = tpu.matmul %1, %2, %cst {dimension_numbers = #tpu.dot_dimension_numbers<[1], [0], [0], [1], [0, 0, 1, 1], [], []>} : vector<8x16xbf16>, vector<16x512xbf16>, vector<8x512xf32> -> vector<8x512xf32>
    %c0_3 = arith.constant 0 : index
    %c0_4 = arith.constant 0 : index
    %4 = vector.load %arg2[%c0_3, %c0_4] : memref<8x4xf32, #tpu.memory_space<vmem>>, vector<8x4xf32>
    %5 = arith.truncf %4 : vector<8x4xf32> to vector<8x4xbf16>
    %c0_5 = arith.constant 0 : index
    %c0_6 = arith.constant 0 : index
    %6 = vector.load %arg4[%c0_5, %c0_6] : memref<4x512xbf16, #tpu.memory_space<vmem>>, vector<4x512xbf16>
    %cst_7 = arith.constant dense<0.000000e+00> : vector<8x512xf32>
    %7 = tpu.matmul %5, %6, %cst_7 {dimension_numbers = #tpu.dot_dimension_numbers<[1], [0], [0], [1], [0, 0, 1, 1], [], []>} : vector<8x4xbf16>, vector<4x512xbf16>, vector<8x512xf32> -> vector<8x512xf32>
    %8 = arith.addf %3, %7 : vector<8x512xf32>
    %cst_8 = arith.constant dense<0.000000e+00> : vector<512xf32>
    %9 = vector.multi_reduction <add>, %8, %cst_8 [0] : vector<8x512xf32> to vector<512xf32>
    %10 = vector.shape_cast %9 : vector<512xf32> to vector<1x512xf32>
    %c0_9 = arith.constant 0 : index
    %c0_10 = arith.constant 0 : index
    %c0_11 = arith.constant 0 : index
    %11 = vector.load %arg5[%c0_9, %c0_10, %c0_11] : memref<1x2x512xf32, #tpu.memory_space<vmem>>, vector<1x1x512xf32>
    %12 = vector.shape_cast %11 : vector<1x1x512xf32> to vector<1x512xf32>
    %13 = vector.shape_cast %10 : vector<1x512xf32> to vector<1x1x512xf32>
    tpu.vector_store %arg5[%c0_9, %c0_10, %c0_11], %13 {strides = array<i32>} : memref<1x2x512xf32, #tpu.memory_space<vmem>>, vector<1x1x512xf32>,
    %14 = arith.mulf %8, %8 : vector<8x512xf32>
    %cst_12 = arith.constant dense<0.000000e+00> : vector<512xf32>
    %15 = vector.multi_reduction <add>, %14, %cst_12 [0] : vector<8x512xf32> to vector<512xf32>
    %16 = vector.shape_cast %15 : vector<512xf32> to vector<1x512xf32>
    %c0_13 = arith.constant 0 : index
    %c1 = arith.constant 1 : index
    %c0_14 = arith.constant 0 : index
    %17 = vector.load %arg5[%c0_13, %c1, %c0_14] : memref<1x2x512xf32, #tpu.memory_space<vmem>>, vector<1x1x512xf32>
    %18 = vector.shape_cast %17 : vector<1x1x512xf32> to vector<1x512xf32>
    %19 = vector.shape_cast %16 : vector<1x512xf32> to vector<1x1x512xf32>
    tpu.vector_store %arg5[%c0_13, %c1, %c0_14], %19 {strides = array<i32>} : memref<1x2x512xf32, #tpu.memory_space<vmem>>, vector<1x1x512xf32>,
    return
  }
  func.func @transform_0(%arg0: i32) -> (i32, i32) {
    %c0_i32 = arith.constant 0 : i32
    %c0_i32_0 = arith.constant 0 : i32
    return %arg0, %c0_i32 : i32, i32
  }
  func.func @transform_1(%arg0: i32) -> (i32, i32) {
    %c0_i32 = arith.constant 0 : i32
    %c0_i32_0 = arith.constant 0 : i32
    return %arg0, %c0_i32 : i32, i32
  }
  func.func @transform_2(%arg0: i32) -> (i32, i32) {
    %c0_i32 = arith.constant 0 : i32
    %c0_i32_0 = arith.constant 0 : i32
    %c0_i32_1 = arith.constant 0 : i32
    return %c0_i32, %c0_i32_0 : i32, i32
  }
  func.func @transform_3(%arg0: i32) -> (i32, i32) {
    %c0_i32 = arith.constant 0 : i32
    %c0_i32_0 = arith.constant 0 : i32
    %c0_i32_1 = arith.constant 0 : i32
    return %c0_i32, %c0_i32_0 : i32, i32
  }
  func.func @transform_4(%arg0: i32) -> (i32, i32, i32) {
    %c0_i32 = arith.constant 0 : i32
    %c0_i32_0 = arith.constant 0 : i32
    %c0_i32_1 = arith.constant 0 : i32
    return %arg0, %c0_i32, %c0_i32_0 : i32, i32, i32
  }
}

</mosaic_0001>

<llo_original>
// kernel: tpu_custom_call.1
$region0: #{tpu_custom_call.1}
  #allocation0 [shape = 'u32[]', space=smem, size = 0x4, offset = 0x4, fixed_abs, tag = 'smem constant byte address 0x4 - core index']
  #allocation1 [shape = 'u32[144,128]{1,0:T(1,128)}', space=vmem, size = 0x12000, scoped, tag = 'internal scratch']
  %s0 = inlined_call_operand.vmem [shape: f32[8,16], index: 0, kind: input, shape index: {}]
  %s1 = inlined_call_operand.vmem [shape: f32[8,4], index: 1, kind: input, shape index: {}]
  %s2 = inlined_call_operand.hbm [shape: bf16[16,512], index: 2, kind: input, shape index: {}]
  %s3 = inlined_call_operand.vmem [shape: bf16[4,512], index: 3, kind: input, shape index: {}]
  %s4 = inlined_call_operand.hbm [shape: f32[1,2,512], index: 4, kind: output, shape index: {}]
  %s5 = sld [smem:[#allocation0]]
  $region30: #{tpu_custom_call.1} parent=0
    _
  %s7 = ssub.s32 1, %s5
  %s8 = scalar_select 0, %s7, %s5
  $region1: #{tpu_custom_call.1} parent=0
    #allocation2 [shape = 'u8[16384]{0}', space=vmem, size = 0x4000, scoped, tag = 'input window, operand 2, single buffered']
    #allocation3 [shape = 's32[1]{0}', space=sflag, size = 0x4, scoped, tag = 'scoped memory for tpu_custom_call.1']
    #allocation4 [shape = 's32[1]{0}', space=sflag, size = 0x4, scoped, tag = 'scoped memory for tpu_custom_call.1']
    #allocation5 [shape = 'u8[4096]{0}', space=vmem, size = 0x1000, scoped, tag = 'output window, operand 0, single buffered']
    %9 = vsyncpa [#allocation3], 0
    %10 = vsyncpa [#allocation4], 0
    // Predicated region
    $region2: #{tpu_custom_call.1} parent=1 // pred_check
      _
    $region3: #{tpu_custom_call.1} parent=1 // pred_check_branch
      %12 = sbr.rel (0) target = $region5
    $region4: #{tpu_custom_call.1} parent=1 // pred_region
      _
    $region5: #{tpu_custom_call.1} parent=1 // pred_fallthru
      _
    // Predicated region
    $region6: #{tpu_custom_call.1} parent=1 // pred_check
      _
    $region7: #{tpu_custom_call.1} parent=1 // pred_check_branch
      %14 = sbr.rel (0) target = $region9
    $region8: #{tpu_custom_call.1} parent=1 // pred_region
      _
    $region9: #{tpu_custom_call.1} parent=1 // pred_fallthru
      _
    // Predicated region
    $region10: #{tpu_custom_call.1} parent=1 // pred_check
      _
    $region11: #{tpu_custom_call.1} parent=1 // pred_check_branch
      %16 = sbr.rel (0) target = $region13
    $region12: #{tpu_custom_call.1} parent=1 // pred_region
      %s18 = ssub.s32 512, 512
      %19 = vsyncadd [#allocation3], %s18
      %s20 = sshll.u32 [#allocation2], 4
      %s21 = int_to_ptr.vmem [resolvable:$true] %s20
      %26 = dma.hbm_to_vmem [thread:$0]  %s2, 512, %s21, [#allocation3], 256, 256, 16
    $region13: #{tpu_custom_call.1} parent=1 // pred_fallthru
      _
    // Predicated region
    $region14: #{tpu_custom_call.1} parent=1 // pred_check
      _
    $region15: #{tpu_custom_call.1} parent=1 // pred_check_branch
      %28 = sbr.rel (0) target = $region17
    $region16: #{tpu_custom_call.1} parent=1 // pred_region
      _
    $region17: #{tpu_custom_call.1} parent=1 // pred_fallthru
      _
    // Predicated region
    $region18: #{tpu_custom_call.1} parent=1 // pred_check
      _
    $region19: #{tpu_custom_call.1} parent=1 // pred_check_branch
      %30 = sbr.rel (0) target = $region21
    $region20: #{tpu_custom_call.1} parent=1 // pred_region
      %31 = dma.done [#allocation3], 512
    $region21: #{tpu_custom_call.1} parent=1 // pred_fallthru
      _
    %v33 = vld [vmem:[%s0] sm:$0xff]
    %v34 = vpack.c.bf16 %v33, %v33
    %v35 = vld [vmem:[#allocation2] sm:$0xff]
    %v36 = vld [vmem:[#allocation2 + $0x8] sm:$0xff]
    %v37 = vld [vmem:[#allocation2 + $0x10] sm:$0xff]
    %v38 = vld [vmem:[#allocation2 + $0x18] sm:$0xff]
    %v39 = vld [vmem:[%s1] sm:$0xff]
    %v40 = vpack.c.bf16 %v39, %v39
    %v41 = vld [vmem:[%s3] sm:$0xff]
    %v43 = vcombine.high %v41, %v41
    %v45 = vunpack.c.l.s4 1983009808
    %v46 = vunpack.c.0.s8 %v45
    %v47 = vlaneseq
    %v48 = vshrl.u32 %v47, 7
    %v49 = vsub.s32 %v46, %v48
    %v50 = vrot.slane %v41, %v49
    %v52 = vunpack.c.l.s4 1983009808
    %v53 = vunpack.c.0.s8 %v52
    %v54 = vlaneseq
    %v55 = vshrl.u32 %v54, 7
    %v56 = vsub.s32 %v53, %v55
    %v57 = vrot.slane %v43, %v56
    %v58 = vcombine.high %v50, %v50
    %v59 = vcombine.high %v57, %v57
    %vm60 = vcmask 31744
    %v62 = vsel %vm60, %v40, 0
    %vm64 = vcmask 1041408
    %v66 = vsel %vm64, %v50, 0
    %v69 = vsel %vm64, %v58, 0
    %v72 = vsel %vm64, %v57, 0
    %v75 = vsel %vm64, %v59, 0
    %77 = vmatprep.subr.bf16.mxu0 %v69
    %78 = vmatpush1.bf16.msra.mxu0 %v66
    %79 = vmatprep.subr.bf16.mxu0 0
    %80 = vmatpush1.bf16.msra.mxu0 0
    %81 = vmatprep.subr.bf16.mxu0 0
    %82 = vmatpush1.bf16.msra.mxu0 0
    %83 = vmatprep.subr.bf16.mxu0 0
    %84 = vmatpush1.bf16.msra.mxu0 0
    %85 = vmatprep.subr.bf16.mxu0 0
    %86 = vmatpush1.bf16.msra.mxu0 0
    %87 = vmatprep.subr.bf16.mxu0 0
    %88 = vmatpush1.bf16.msra.mxu0 0
    %89 = vmatprep.subr.bf16.mxu0 0
    %90 = vmatpush1.bf16.msra.mxu0 0
    %91 = vmatprep.subr.bf16.mxu0 0
    %92 = vmatpush1.bf16.msra.mxu0 0
    %93 = vmatprep.subr.bf16.mxu0 0
    %94 = vmatpush1.bf16.msra.mxu0 0
    %95 = vmatprep.subr.bf16.mxu0 0
    %96 = vmatpush1.bf16.msra.mxu0 0
    %97 = vmatprep.subr.bf16.mxu0 0
    %98 = vmatpush1.bf16.msra.mxu0 0
    %99 = vmatprep.subr.bf16.mxu0 0
    %100 = vmatpush1.bf16.msra.mxu0 0
    %101 = vmatprep.subr.bf16.mxu0 0
    %102 = vmatpush1.bf16.msra.mxu0 0
    %103 = vmatprep.subr.bf16.mxu0 0
    %104 = vmatpush1.bf16.msra.mxu0 0
    %105 = vmatprep.subr.bf16.mxu0 0
    %106 = vmatpush1.bf16.msra.mxu0 0
    %107 = vmatprep.subr.bf16.mxu0 0
    %108 = vmatpush1.bf16.msra.mxu0 0
    %109 = vmatprep.mubr.bf16.mxu0 0
    %110 = vmatmul.mubr.bf16.gmra.mrb[0].mxu0 %v62
    %v111 = vpop.f32.mrb[0].mxu0
    %v112 = vadd.f32 0.0, %v111
    %v113 = vpop.f32.mrb[0].mxu0
    %v114 = vadd.f32 0.0, %v113
    %v115 = vpop.f32.mrb[0].mxu0
    %v116 = vpop.f32.mrb[0].mxu0
    %117 = vdwg.mxu0
    %118 = vmatprep.subr.bf16.mxu0 %v75
    %119 = vmatpush1.bf16.msra.mxu0 %v72
    %120 = vmatprep.subr.bf16.mxu0 0
    %121 = vmatpush1.bf16.msra.mxu0 0
    %122 = vmatprep.subr.bf16.mxu0 0
    %123 = vmatpush1.bf16.msra.mxu0 0
    %124 = vmatprep.subr.bf16.mxu0 0
    %125 = vmatpush1.bf16.msra.mxu0 0
    %126 = vmatprep.subr.bf16.mxu0 0
    %127 = vmatpush1.bf16.msra.mxu0 0
    %128 = vmatprep.subr.bf16.mxu0 0
    %129 = vmatpush1.bf16.msra.mxu0 0
    %130 = vmatprep.subr.bf16.mxu0 0
    %131 = vmatpush1.bf16.msra.mxu0 0
    %132 = vmatprep.subr.bf16.mxu0 0
    %133 = vmatpush1.bf16.msra.mxu0 0
    %134 = vmatprep.subr.bf16.mxu0 0
    %135 = vmatpush1.bf16.msra.mxu0 0
    %136 = vmatprep.subr.bf16.mxu0 0
    %137 = vmatpush1.bf16.msra.mxu0 0
    %138 = vmatprep.subr.bf16.mxu0 0
    %139 = vmatpush1.bf16.msra.mxu0 0
    %140 = vmatprep.subr.bf16.mxu0 0
    %141 = vmatpush1.bf16.msra.mxu0 0
    %142 = vmatprep.subr.bf16.mxu0 0
    %143 = vmatpush1.bf16.msra.mxu0 0
    %144 = vmatprep.subr.bf16.mxu0 0
    %145 = vmatpush1.bf16.msra.mxu0 0
    %146 = vmatprep.subr.bf16.mxu0 0
    %147 = vmatpush1.bf16.msra.mxu0 0
    %148 = vmatprep.subr.bf16.mxu0 0
    %149 = vmatpush1.bf16.msra.mxu0 0
    %150 = vmatprep.mubr.bf16.mxu0 0
    %151 = vmatmul.mubr.bf16.gmra.mrb[0].mxu0 %v62
    %v152 = vpop.f32.mrb[0].mxu0
    %v153 = vadd.f32 0.0, %v152
    %v154 = vpop.f32.mrb[0].mxu0
    %v155 = vadd.f32 0.0, %v154
    %v156 = vpop.f32.mrb[0].mxu0
    %v157 = vpop.f32.mrb[0].mxu0
    %158 = vdwg.mxu0
    %v163 = vunpack.c.l.b16 %v35
    %v164 = vunpack.c.h.b16 %v35
    %v165 = vunpack.c.l.b16 %v36
    %v166 = vunpack.c.h.b16 %v36
    %v167 = vunpack.c.l.b16 %v37
    %v168 = vunpack.c.h.b16 %v37
    %v169 = vunpack.c.l.b16 %v38
    %v170 = vunpack.c.h.b16 %v38
    %v171 = vpack.c.b16 %v167, %v163
    %v172 = vpack.c.b16 %v168, %v164
    %v173 = vpack.c.b16 %v169, %v165
    %v174 = vpack.c.b16 %v170, %v166
    %vm179 = vcmask 130048
    %v181 = vsel %vm179, %v34, 0
    %183 = vmatprep.subr.bf16.mxu0 %v172
    %184 = vmatpush1.bf16.msra.mxu0 %v171
    %185 = vmatprep.subr.bf16.mxu0 0
    %186 = vmatpush1.bf16.msra.mxu0 0
    %187 = vmatprep.subr.bf16.mxu0 0
    %188 = vmatpush1.bf16.msra.mxu0 0
    %189 = vmatprep.subr.bf16.mxu0 0
    %190 = vmatpush1.bf16.msra.mxu0 0
    %191 = vmatprep.subr.bf16.mxu0 0
    %192 = vmatpush1.bf16.msra.mxu0 0
    %193 = vmatprep.subr.bf16.mxu0 0
    %194 = vmatpush1.bf16.msra.mxu0 0
    %195 = vmatprep.subr.bf16.mxu0 0
    %196 = vmatpush1.bf16.msra.mxu0 0
    %197 = vmatprep.subr.bf16.mxu0 0
    %198 = vmatpush1.bf16.msra.mxu0 0
    %199 = vmatprep.subr.bf16.mxu0 0
    %200 = vmatpush1.bf16.msra.mxu0 0
    %201 = vmatprep.subr.bf16.mxu0 0
    %202 = vmatpush1.bf16.msra.mxu0 0
    %203 = vmatprep.subr.bf16.mxu0 0
    %204 = vmatpush1.bf16.msra.mxu0 0
    %205 = vmatprep.subr.bf16.mxu0 0
    %206 = vmatpush1.bf16.msra.mxu0 0
    %207 = vmatprep.subr.bf16.mxu0 0
    %208 = vmatpush1.bf16.msra.mxu0 0
    %209 = vmatprep.subr.bf16.mxu0 0
    %210 = vmatpush1.bf16.msra.mxu0 0
    %211 = vmatprep.subr.bf16.mxu0 0
    %212 = vmatpush1.bf16.msra.mxu0 0
    %213 = vmatprep.subr.bf16.mxu0 0
    %214 = vmatpush1.bf16.msra.mxu0 0
    %215 = vmatprep.mubr.bf16.mxu0 0
    %216 = vmatmul.mubr.bf16.gmra.mrb[0].mxu0 %v181
    %v217 = vpop.f32.mrb[0].mxu0
    %v218 = vadd.f32 %v112, %v217
    %v219 = vpop.f32.mrb[0].mxu0
    %v220 = vadd.f32 %v114, %v219
    %v221 = vpop.f32.mrb[0].mxu0
    %v222 = vpop.f32.mrb[0].mxu0
    %223 = vdwg.mxu0
    %224 = vmatprep.subr.bf16.mxu0 %v174
    %225 = vmatpush1.bf16.msra.mxu0 %v173
    %226 = vmatprep.subr.bf16.mxu0 0
    %227 = vmatpush1.bf16.msra.mxu0 0
    %228 = vmatprep.subr.bf16.mxu0 0
    %229 = vmatpush1.bf16.msra.mxu0 0
    %230 = vmatprep.subr.bf16.mxu0 0
    %231 = vmatpush1.bf16.msra.mxu0 0
    %232 = vmatprep.subr.bf16.mxu0 0
    %233 = vmatpush1.bf16.msra.mxu0 0
    %234 = vmatprep.subr.bf16.mxu0 0
    %235 = vmatpush1.bf16.msra.mxu0 0
    %236 = vmatprep.subr.bf16.mxu0 0
    %237 = vmatpush1.bf16.msra.mxu0 0
    %238 = vmatprep.subr.bf16.mxu0 0
    %239 = vmatpush1.bf16.msra.mxu0 0
    %240 = vmatprep.subr.bf16.mxu0 0
    %241 = vmatpush1.bf16.msra.mxu0 0
    %242 = vmatprep.subr.bf16.mxu0 0
    %243 = vmatpush1.bf16.msra.mxu0 0
    %244 = vmatprep.subr.bf16.mxu0 0
    %245 = vmatpush1.bf16.msra.mxu0 0
    %246 = vmatprep.subr.bf16.mxu0 0
    %247 = vmatpush1.bf16.msra.mxu0 0
    %248 = vmatprep.subr.bf16.mxu0 0
    %249 = vmatpush1.bf16.msra.mxu0 0
    %250 = vmatprep.subr.bf16.mxu0 0
    %251 = vmatpush1.bf16.msra.mxu0 0
    %252 = vmatprep.subr.bf16.mxu0 0
    %253 = vmatpush1.bf16.msra.mxu0 0
    %254 = vmatprep.subr.bf16.mxu0 0
    %255 = vmatpush1.bf16.msra.mxu0 0
    %256 = vmatprep.mubr.bf16.mxu0 0
    %257 = vmatmul.mubr.bf16.gmra.mrb[0].mxu0 %v181
    %v258 = vpop.f32.mrb[0].mxu0
    %v259 = vadd.f32 %v153, %v258
    %v260 = vpop.f32.mrb[0].mxu0
    %v261 = vadd.f32 %v155, %v260
    %v262 = vpop.f32.mrb[0].mxu0
    %v263 = vpop.f32.mrb[0].mxu0
    %264 = vdwg.mxu0
    %v265 = vrot.slane %v218, 4
    %v266 = vadd.f32 %v218, %v265
    %v267 = vrot.slane %v266, 2
    %v268 = vadd.f32 %v266, %v267
    %v269 = vrot.slane %v268, 1
    %v270 = vadd.f32 %v268, %v269
    %v271 = vrot.slane %v220, 4
    %v272 = vadd.f32 %v220, %v271
    %v273 = vrot.slane %v272, 2
    %v274 = vadd.f32 %v272, %v273
    %v275 = vrot.slane %v274, 1
    %v276 = vadd.f32 %v274, %v275
    %v277 = vrot.slane %v259, 4
    %v278 = vadd.f32 %v259, %v277
    %v279 = vrot.slane %v278, 2
    %v280 = vadd.f32 %v278, %v279
    %v281 = vrot.slane %v280, 1
    %v282 = vadd.f32 %v280, %v281
    %v283 = vrot.slane %v261, 4
    %v284 = vadd.f32 %v261, %v283
    %v285 = vrot.slane %v284, 2
    %v286 = vadd.f32 %v284, %v285
    %v287 = vrot.slane %v286, 1
    %v288 = vadd.f32 %v286, %v287
    %v293 = vcombine.low %v270, %v276
    %v294 = vcombine.low %v282, %v288
    %v296 = vunpack.c.l.s4 1966171168
    %v297 = vunpack.c.0.s8 %v296
    %v298 = vlaneseq
    %v299 = vshrl.u32 %v298, 7
    %v300 = vsub.s32 %v297, %v299
    %v301 = vrot.slane %v293, %v300
    %v303 = vunpack.c.l.s4 1966171168
    %v304 = vunpack.c.0.s8 %v303
    %v305 = vlaneseq
    %v306 = vshrl.u32 %v305, 7
    %v307 = vsub.s32 %v304, %v306
    %v308 = vrot.slane %v294, %v307
    %v309 = vcombine.low %v301, %v308
    %v311 = vunpack.c.l.s4 1966171168
    %v312 = vunpack.c.0.s8 %v311
    %v313 = vlaneseq
    %v314 = vshrl.u32 %v313, 7
    %v315 = vsub.s32 %v312, %v314
    %v316 = vrot.slane %v309, %v315
    %v318 = vlaneseq
    %vm319 = vcmp.ge.s32.totalorder %v318, 0
    %vm320 = vcmp.lt.s32.totalorder %v318, 512
    %vm321 = vmand %vm319, %vm320
    %322 = vst.msk [vmem:[#allocation5] ss:$2 sm:$0xf] %vm321, %v316
    %v323 = vmul.f32 %v218, %v218
    %v324 = vmul.f32 %v220, %v220
    %v325 = vmul.f32 %v259, %v259
    %v326 = vmul.f32 %v261, %v261
    %v327 = vrot.slane %v323, 4
    %v328 = vadd.f32 %v323, %v327
    %v329 = vrot.slane %v328, 2
    %v330 = vadd.f32 %v328, %v329
    %v331 = vrot.slane %v330, 1
    %v332 = vadd.f32 %v330, %v331
    %v333 = vrot.slane %v324, 4
    %v334 = vadd.f32 %v324, %v333
    %v335 = vrot.slane %v334, 2
    %v336 = vadd.f32 %v334, %v335
    %v337 = vrot.slane %v336, 1
    %v338 = vadd.f32 %v336, %v337
    %v339 = vrot.slane %v325, 4
    %v340 = vadd.f32 %v325, %v339
    %v341 = vrot.slane %v340, 2
    %v342 = vadd.f32 %v340, %v341
    %v343 = vrot.slane %v342, 1
    %v344 = vadd.f32 %v342, %v343
    %v345 = vrot.slane %v326, 4
    %v346 = vadd.f32 %v326, %v345
    %v347 = vrot.slane %v346, 2
    %v348 = vadd.f32 %v346, %v347
    %v349 = vrot.slane %v348, 1
    %v350 = vadd.f32 %v348, %v349
    %v355 = vcombine.low %v332, %v338
    %v356 = vcombine.low %v344, %v350
    %v358 = vunpack.c.l.s4 1966171168
    %v359 = vunpack.c.0.s8 %v358
    %v360 = vlaneseq
    %v361 = vshrl.u32 %v360, 7
    %v362 = vsub.s32 %v359, %v361
    %v363 = vrot.slane %v355, %v362
    %v365 = vunpack.c.l.s4 1966171168
    %v366 = vunpack.c.0.s8 %v365
    %v367 = vlaneseq
    %v368 = vshrl.u32 %v367, 7
    %v369 = vsub.s32 %v366, %v368
    %v370 = vrot.slane %v356, %v369
    %v371 = vcombine.low %v363, %v370
    %v373 = vunpack.c.l.s4 1966171168
    %v374 = vunpack.c.0.s8 %v373
    %v375 = vlaneseq
    %v376 = vshrl.u32 %v375, 7
    %v377 = vsub.s32 %v374, %v376
    %v378 = vrot.slane %v371, %v377
    %s380 = scalar_lea.vmem [#allocation5], 1
    %381 = vst.msk [vmem:[%s380] ss:$2 sm:$0xf] %vm321, %v378
    // Predicated region
    $region22: #{tpu_custom_call.1} parent=1 // pred_check
      _
    $region23: #{tpu_custom_call.1} parent=1 // pred_check_branch
      %383 = sbr.rel (0) target = $region25
    $region24: #{tpu_custom_call.1} parent=1 // pred_region
      %s385 = ssub.s32 128, 128
      %386 = vsyncadd [#allocation4], %s385
      %s388 = sshll.u32 [#allocation5], 4
      %s389 = int_to_ptr.vmem [resolvable:$true] %s388
      %391 = dma.vmem_to_hbm [thread:$0]  %s389, 128, %s4, [#allocation4]
    $region25: #{tpu_custom_call.1} parent=1 // pred_fallthru
      _
    // Predicated region
    $region26: #{tpu_custom_call.1} parent=1 // pred_check
      _
    $region27: #{tpu_custom_call.1} parent=1 // pred_check_branch
      %393 = sbr.rel (0) target = $region29
    $region28: #{tpu_custom_call.1} parent=1 // pred_region
      %394 = dma.done [#allocation4], 128
    $region29: #{tpu_custom_call.1} parent=1 // pred_fallthru
      _
    %395 = vsyncpa [#allocation3], 1
    %396 = vsyncpa [#allocation4], 1

</llo_original>
